<compile_context>
chip_gen: v5e
topology: v5e:2x2
jax: 0.10.0
libtpu: 0.0.40
codegen_flags: <defaults>
</compile_context>

<pallas_src>
import jax
import jax.numpy as jnp
from jax import lax
from jax.experimental import pallas as pl
from jax.experimental.pallas import tpu as pltpu

LANE = 128          # lanes per vreg row
SPR = LANE // 2     # samples per interleaved 128-lane row


def _logreg_kernel(b_ref, m_ref, x_ref, o_ref):
    # b_ref: (1,)   f32 in SMEM  -> bias
    # m_ref: (128, 64) f32 in VMEM -> de-interleave weight matrix (resident)
    # x_ref: (TR, 128) f32 in VMEM -> interleaved [x0,x1] pairs, 64 samples/row
    # o_ref: (TR, 64)  f32 in VMEM -> sigmoid(z) for sample 64*r + j at [r, j]
    z = jnp.dot(
        x_ref[...], m_ref[...],
        preferred_element_type=jnp.float32,
        precision=lax.Precision.HIGHEST,   # exact f32 dot (only 2 real terms)
    ) + b_ref[0]
    # sigmoid via a single EUP tanh (cheaper than exp + exact divide).
    o_ref[...] = 0.5 * (jnp.tanh(0.5 * z) + 1.0)


def logistic_regression(x, weight, bias, *, max_block_rows=4096):
    """x: (B, 2) f32, weight: (1, 2) f32 (PyTorch layout), bias: (1,) f32.

    Returns sigmoid(x @ weight.T + bias) with shape (B, 1), f32.
    """
    B = x.shape[0]

    # --- input: keep natural (B, 2) row-major layout; only free reshapes ------
    x_flat = x.astype(jnp.float32).reshape(-1)            # (2B,), free
    rows = pl.cdiv(x_flat.shape[0], LANE)
    pad = rows * LANE - x_flat.shape[0]
    if pad:
        x_flat = jnp.pad(x_flat, (0, pad))                # tail only; no-op when aligned
    x2d = x_flat.reshape(rows, LANE)                      # (rows, 128), free

    # --- de-interleave weight matrix + bias scalar ----------------------------
    w = weight.reshape(-1).astype(jnp.float32)            # [w0, w1]
    b = bias.reshape(-1).astype(jnp.float32)              # (1,)
    l_idx = jnp.arange(LANE)[:, None]                     # (128, 1)
    j_idx = jnp.arange(SPR)[None, :]                      # (1, 64)
    m = jnp.where(l_idx == 2 * j_idx, w[0],
                  jnp.where(l_idx == 2 * j_idx + 1, w[1], 0.0)).astype(jnp.float32)

    # --- block-row selection ---------------------------------------------------
    # As large as possible (fewer grid steps), but keep >=2 blocks when there is
    # enough work so v7x can shard the "parallel" axis across its 2 TensorCores.
    tr = min(max_block_rows, rows)
    if tr < rows:
        tr = max(8, (tr // 8) * 8)                         # (8,128) block rule
    elif rows >= 16:
        half = (pl.cdiv(rows, 2) + 7) // 8 * 8
        tr = half if half < rows else rows
    grid = (pl.cdiv(rows, tr),)                            # ragged last block OK

    out2d = pl.pallas_call(
        _logreg_kernel,
        out_shape=jax.ShapeDtypeStruct((rows, SPR), jnp.float32),
        grid=grid,
        in_specs=[
            pl.BlockSpec(memory_space=pltpu.SMEM),         # bias (1,) scalar
            pl.BlockSpec((LANE, SPR), lambda i: (0, 0)),   # M: same block, stays resident
            pl.BlockSpec((tr, LANE), lambda i: (i, 0)),    # x tile (sublane+lane dense)
        ],
        out_specs=pl.BlockSpec((tr, SPR), lambda i: (i, 0)),
        compiler_params=pltpu.CompilerParams(
            dimension_semantics=("parallel",)),
    )(b, m, x2d)

    # Sample 64*r + j lives at out2d[r, j]: flatten is the natural order (free),
    # slice off padded tail, reshape to (B, 1) (free).
    return out2d.reshape(-1)[:B].reshape(B, 1)


if __name__ == "__main__":
    key = jax.random.PRNGKey(0)
    kx, kw, kb = jax.random.split(key, 3)

    B, IN, OUT = 8, 2, 1
    x = jax.random.normal(kx, (B, IN), dtype=jnp.float32)

    # Deterministic param init mimicking nn.Linear: U(-1/sqrt(in), 1/sqrt(in))
    bound = 1.0 / jnp.sqrt(jnp.float32(IN))
    weight = jax.random.uniform(kw, (OUT, IN), jnp.float32, -bound, bound)
    bias = jax.random.uniform(kb, (OUT,), jnp.float32, -bound, bound)

    out = logistic_regression(x, weight, bias)
    out = jax.block_until_ready(out)

    # Reference check in plain JAX.  atol covers any MXU pass scheme for the f32
    # dot; a layout/ordering bug would show up as O(0.1-1) errors.
    ref = jax.nn.sigmoid(x @ weight.T + bias)
    assert out.shape == (B, OUT)
    assert jnp.allclose(out, ref, atol=2e-3), "mismatch vs reference"
    print("KERNEL_OK")
</pallas_src>

<mosaic_0001>
module attributes {stable_mosaic.version = 11 : i64} {
  func.func @_logreg_kernel(%arg0: i32, %arg1: memref<1xf32, #tpu.memory_space<smem>>, %arg2: memref<128x64xf32, #tpu.memory_space<vmem>>, %arg3: memref<1x128xf32, #tpu.memory_space<vmem>>, %arg4: memref<1x64xf32, #tpu.memory_space<vmem>>) attributes {dimension_semantics = [#tpu.dimension_semantics<parallel>], iteration_bounds = array<i64: 1>, scalar_prefetch = 0 : i64, scratch_operands = 0 : i64, tpu.core_type = #tpu.core_type<tc>, window_params = [{transform_indices = @transform_0, window_bounds = array<i64: 1>}, {pipeline_mode = #tpu.pipeline_mode<synchronous>, transform_indices = @transform_1, window_bounds = array<i64: 128, 64>}, {transform_indices = @transform_2, window_bounds = array<i64: 1, 128>}, {transform_indices = @transform_3, window_bounds = array<i64: 1, 64>}]} {
    %c0 = arith.constant 0 : index
    %c0_0 = arith.constant 0 : index
    %0 = vector.load %arg3[%c0, %c0_0] : memref<1x128xf32, #tpu.memory_space<vmem>>, vector<1x128xf32>
    %c0_1 = arith.constant 0 : index
    %c0_2 = arith.constant 0 : index
    %1 = vector.load %arg2[%c0_1, %c0_2] : memref<128x64xf32, #tpu.memory_space<vmem>>, vector<128x64xf32>
    %cst = arith.constant dense<0.000000e+00> : vector<1x64xf32>
    %2 = tpu.matmul %0, %1, %cst {dimension_numbers = #tpu.dot_dimension_numbers<[1], [0], [0], [1], [0, 0, 1, 1], [], []>, precision = #tpu.contract_precision<fp32>} : vector<1x128xf32>, vector<128x64xf32>, vector<1x64xf32> -> vector<1x64xf32>
    %c0_3 = arith.constant 0 : index
    %3 = memref.load %arg1[%c0_3] : memref<1xf32, #tpu.memory_space<smem>>
    %4 = vector.broadcast %3 : f32 to vector<1x64xf32>
    %5 = arith.addf %2, %4 : vector<1x64xf32>
    %cst_4 = arith.constant 5.000000e-01 : f32
    %6 = vector.broadcast %cst_4 : f32 to vector<1x64xf32>
    %7 = arith.mulf %6, %5 : vector<1x64xf32>
    %8 = math.tanh %7 : vector<1x64xf32>
    %cst_5 = arith.constant 1.000000e+00 : f32
    %9 = vector.broadcast %cst_5 : f32 to vector<1x64xf32>
    %10 = arith.addf %8, %9 : vector<1x64xf32>
    %cst_6 = arith.constant 5.000000e-01 : f32
    %11 = vector.broadcast %cst_6 : f32 to vector<1x64xf32>
    %12 = arith.mulf %11, %10 : vector<1x64xf32>
    %c0_7 = arith.constant 0 : index
    %c0_8 = arith.constant 0 : index
    %13 = vector.load %arg4[%c0_7, %c0_8] : memref<1x64xf32, #tpu.memory_space<vmem>>, vector<1x64xf32>
    tpu.vector_store %arg4[%c0_7, %c0_8], %12 {strides = array<i32>} : memref<1x64xf32, #tpu.memory_space<vmem>>, vector<1x64xf32>,
    return
  }
  func.func @transform_0(%arg0: i32) -> i32 {
    %c0_i32 = arith.constant 0 : i32
    %c0_i32_0 = arith.constant 0 : i32
    return %c0_i32 : i32
  }
  func.func @transform_1(%arg0: i32) -> (i32, i32) {
    %c0_i32 = arith.constant 0 : i32
    %c0_i32_0 = arith.constant 0 : i32
    %c0_i32_1 = arith.constant 0 : i32
    return %c0_i32, %c0_i32_0 : i32, i32
  }
  func.func @transform_2(%arg0: i32) -> (i32, i32) {
    %c0_i32 = arith.constant 0 : i32
    %c0_i32_0 = arith.constant 0 : i32
    return %arg0, %c0_i32 : i32, i32
  }
  func.func @transform_3(%arg0: i32) -> (i32, i32) {
    %c0_i32 = arith.constant 0 : i32
    %c0_i32_0 = arith.constant 0 : i32
    return %arg0, %c0_i32 : i32, i32
  }
}

</mosaic_0001>

<llo_original>
// kernel: tpu_custom_call.1
$region0: #{tpu_custom_call.1}
  #allocation0 [shape = 'u32[]', space=smem, size = 0x4, offset = 0x4, fixed_abs, tag = 'smem constant byte address 0x4 - core index']
  #allocation1 [shape = 'u32[72,128]{1,0:T(1,128)}', space=vmem, size = 0x9000, scoped, tag = 'internal scratch']
  #allocation2 [shape = 'f32[1]{0:T(128)S(6)}', space=smem, size = 0x200, scoped, tag = 'scoped memory for tpu_custom_call.1']
  %s0 = inlined_call_operand.<no memory space> [shape: f32[1], index: 0, kind: input, shape index: {}]
  %s1 = inlined_call_operand.vmem [shape: f32[128,64], index: 1, kind: input, shape index: {}]
  %s2 = inlined_call_operand.vmem [shape: f32[1,128], index: 2, kind: input, shape index: {}]
  %s3 = inlined_call_operand.hbm [shape: f32[1,64], index: 3, kind: output, shape index: {}]
  %s4 = sld [smem:[#allocation0]]
  $region22: #{tpu_custom_call.1} parent=0
    _
  %s6 = ssub.s32 1, %s4
  %s7 = scalar_select 0, %s6, %s4
  %8 = sst [smem:[#allocation2]] %s0
  $region1: #{tpu_custom_call.1} parent=0
    #allocation3 [shape = 'u8[512]{0}', space=vmem, size = 0x400, scoped, tag = 'output window, operand 0, single buffered']
    #allocation4 [shape = 's32[1]{0}', space=sflag, size = 0x4, scoped, tag = 'scoped memory for tpu_custom_call.1']
    %9 = vsyncpa [#allocation4], 0
    // Predicated region
    $region2: #{tpu_custom_call.1} parent=1 // pred_check
      _
    $region3: #{tpu_custom_call.1} parent=1 // pred_check_branch
      %11 = sbr.rel (0) target = $region5
    $region4: #{tpu_custom_call.1} parent=1 // pred_region
      _
    $region5: #{tpu_custom_call.1} parent=1 // pred_fallthru
      _
    // Predicated region
    $region6: #{tpu_custom_call.1} parent=1 // pred_check
      _
    $region7: #{tpu_custom_call.1} parent=1 // pred_check_branch
      %13 = sbr.rel (0) target = $region9
    $region8: #{tpu_custom_call.1} parent=1 // pred_region
      _
    $region9: #{tpu_custom_call.1} parent=1 // pred_fallthru
      _
    // Predicated region
    $region10: #{tpu_custom_call.1} parent=1 // pred_check
      _
    $region11: #{tpu_custom_call.1} parent=1 // pred_check_branch
      %15 = sbr.rel (0) target = $region13
    $region12: #{tpu_custom_call.1} parent=1 // pred_region
      _
    $region13: #{tpu_custom_call.1} parent=1 // pred_fallthru
      _
    %v16 = vld [vmem:[%s2] sm:$0x1]
    %v17 = vld [vmem:[%s1] sm:$0xff]
    %v18 = vld [vmem:[%s1 + $0x8] sm:$0xff]
    %v19 = vld [vmem:[%s1 + $0x10] sm:$0xff]
    %v20 = vld [vmem:[%s1 + $0x18] sm:$0xff]
    %v21 = vld [vmem:[%s1 + $0x20] sm:$0xff]
    %v22 = vld [vmem:[%s1 + $0x28] sm:$0xff]
    %v23 = vld [vmem:[%s1 + $0x30] sm:$0xff]
    %v24 = vld [vmem:[%s1 + $0x38] sm:$0xff]
    %v25 = vld [vmem:[%s1 + $0x40] sm:$0xff]
    %v26 = vld [vmem:[%s1 + $0x48] sm:$0xff]
    %v27 = vld [vmem:[%s1 + $0x50] sm:$0xff]
    %v28 = vld [vmem:[%s1 + $0x58] sm:$0xff]
    %v29 = vld [vmem:[%s1 + $0x60] sm:$0xff]
    %v30 = vld [vmem:[%s1 + $0x68] sm:$0xff]
    %v31 = vld [vmem:[%s1 + $0x70] sm:$0xff]
    %v32 = vld [vmem:[%s1 + $0x78] sm:$0xff]
    %s33 = sld [smem:[#allocation2]]
    %v34 = vstv %s33
    %v35 = vand.u32 %v32, 4294901760
    %36 = vmatpush.msra.mxu0 %v35
    %v37 = vand.u32 %v31, 4294901760
    %38 = vmatpush.msra.mxu0 %v37
    %v39 = vand.u32 %v30, 4294901760
    %40 = vmatpush.msra.mxu0 %v39
    %v41 = vand.u32 %v29, 4294901760
    %42 = vmatpush.msra.mxu0 %v41
    %v43 = vand.u32 %v28, 4294901760
    %44 = vmatpush.msra.mxu0 %v43
    %v45 = vand.u32 %v27, 4294901760
    %46 = vmatpush.msra.mxu0 %v45
    %v47 = vand.u32 %v26, 4294901760
    %48 = vmatpush.msra.mxu0 %v47
    %v49 = vand.u32 %v25, 4294901760
    %50 = vmatpush.msra.mxu0 %v49
    %v51 = vand.u32 %v24, 4294901760
    %52 = vmatpush.msra.mxu0 %v51
    %v53 = vand.u32 %v23, 4294901760
    %54 = vmatpush.msra.mxu0 %v53
    %v55 = vand.u32 %v22, 4294901760
    %56 = vmatpush.msra.mxu0 %v55
    %v57 = vand.u32 %v21, 4294901760
    %58 = vmatpush.msra.mxu0 %v57
    %v59 = vand.u32 %v20, 4294901760
    %60 = vmatpush.msra.mxu0 %v59
    %v61 = vand.u32 %v19, 4294901760
    %62 = vmatpush.msra.mxu0 %v61
    %v63 = vand.u32 %v18, 4294901760
    %64 = vmatpush.msra.mxu0 %v63
    %v65 = vand.u32 %v17, 4294901760
    %66 = vmatpush.msra.mxu0 %v65
    %v67 = vand.u32 %v16, 4294901760
    %v68 = vsub.f32 %v16, %v67
    %v69 = vand.u32 %v68, 4294901760
    %v70 = vsub.f32 %v68, %v69
    %v71 = vand.u32 %v70, 4294901760
    %72 = vmatmul.f32.gmra.mxu0 %v71
    %v73 = vpop.f32.mrf.mxu0
    %v74 = vadd.f32 %v34, %v73
    %75 = vdwg.mxu0
    %v76 = vand.u32 %v32, 4294901760
    %v77 = vsub.f32 %v32, %v76
    %v78 = vand.u32 %v77, 4294901760
    %v79 = vsub.f32 %v77, %v78
    %v80 = vand.u32 %v79, 4294901760
    %81 = vmatpush.msra.mxu0 %v80
    %v82 = vand.u32 %v31, 4294901760
    %v83 = vsub.f32 %v31, %v82
    %v84 = vand.u32 %v83, 4294901760
    %v85 = vsub.f32 %v83, %v84
    %v86 = vand.u32 %v85, 4294901760
    %87 = vmatpush.msra.mxu0 %v86
    %v88 = vand.u32 %v30, 4294901760
    %v89 = vsub.f32 %v30, %v88
    %v90 = vand.u32 %v89, 4294901760
    %v91 = vsub.f32 %v89, %v90
    %v92 = vand.u32 %v91, 4294901760
    %93 = vmatpush.msra.mxu0 %v92
    %v94 = vand.u32 %v29, 4294901760
    %v95 = vsub.f32 %v29, %v94
    %v96 = vand.u32 %v95, 4294901760
    %v97 = vsub.f32 %v95, %v96
    %v98 = vand.u32 %v97, 4294901760
    %99 = vmatpush.msra.mxu0 %v98
    %v100 = vand.u32 %v28, 4294901760
    %v101 = vsub.f32 %v28, %v100
    %v102 = vand.u32 %v101, 4294901760
    %v103 = vsub.f32 %v101, %v102
    %v104 = vand.u32 %v103, 4294901760
    %105 = vmatpush.msra.mxu0 %v104
    %v106 = vand.u32 %v27, 4294901760
    %v107 = vsub.f32 %v27, %v106
    %v108 = vand.u32 %v107, 4294901760
    %v109 = vsub.f32 %v107, %v108
    %v110 = vand.u32 %v109, 4294901760
    %111 = vmatpush.msra.mxu0 %v110
    %v112 = vand.u32 %v26, 4294901760
    %v113 = vsub.f32 %v26, %v112
    %v114 = vand.u32 %v113, 4294901760
    %v115 = vsub.f32 %v113, %v114
    %v116 = vand.u32 %v115, 4294901760
    %117 = vmatpush.msra.mxu0 %v116
    %v118 = vand.u32 %v25, 4294901760
    %v119 = vsub.f32 %v25, %v118
    %v120 = vand.u32 %v119, 4294901760
    %v121 = vsub.f32 %v119, %v120
    %v122 = vand.u32 %v121, 4294901760
    %123 = vmatpush.msra.mxu0 %v122
    %v124 = vand.u32 %v24, 4294901760
    %v125 = vsub.f32 %v24, %v124
    %v126 = vand.u32 %v125, 4294901760
    %v127 = vsub.f32 %v125, %v126
    %v128 = vand.u32 %v127, 4294901760
    %129 = vmatpush.msra.mxu0 %v128
    %v130 = vand.u32 %v23, 4294901760
    %v131 = vsub.f32 %v23, %v130
    %v132 = vand.u32 %v131, 4294901760
    %v133 = vsub.f32 %v131, %v132
    %v134 = vand.u32 %v133, 4294901760
    %135 = vmatpush.msra.mxu0 %v134
    %v136 = vand.u32 %v22, 4294901760
    %v137 = vsub.f32 %v22, %v136
    %v138 = vand.u32 %v137, 4294901760
    %v139 = vsub.f32 %v137, %v138
    %v140 = vand.u32 %v139, 4294901760
    %141 = vmatpush.msra.mxu0 %v140
    %v142 = vand.u32 %v21, 4294901760
    %v143 = vsub.f32 %v21, %v142
    %v144 = vand.u32 %v143, 4294901760
    %v145 = vsub.f32 %v143, %v144
    %v146 = vand.u32 %v145, 4294901760
    %147 = vmatpush.msra.mxu0 %v146
    %v148 = vand.u32 %v20, 4294901760
    %v149 = vsub.f32 %v20, %v148
    %v150 = vand.u32 %v149, 4294901760
    %v151 = vsub.f32 %v149, %v150
    %v152 = vand.u32 %v151, 4294901760
    %153 = vmatpush.msra.mxu0 %v152
    %v154 = vand.u32 %v19, 4294901760
    %v155 = vsub.f32 %v19, %v154
    %v156 = vand.u32 %v155, 4294901760
    %v157 = vsub.f32 %v155, %v156
    %v158 = vand.u32 %v157, 4294901760
    %159 = vmatpush.msra.mxu0 %v158
    %v160 = vand.u32 %v18, 4294901760
    %v161 = vsub.f32 %v18, %v160
    %v162 = vand.u32 %v161, 4294901760
    %v163 = vsub.f32 %v161, %v162
    %v164 = vand.u32 %v163, 4294901760
    %165 = vmatpush.msra.mxu0 %v164
    %v166 = vand.u32 %v17, 4294901760
    %v167 = vsub.f32 %v17, %v166
    %v168 = vand.u32 %v167, 4294901760
    %v169 = vsub.f32 %v167, %v168
    %v170 = vand.u32 %v169, 4294901760
    %171 = vmatpush.msra.mxu0 %v170
    %v172 = vand.u32 %v16, 4294901760
    %173 = vmatmul.f32.gmra.mxu0 %v172
    %v174 = vpop.f32.mrf.mxu0
    %v175 = vadd.f32 %v74, %v174
    %176 = vdwg.mxu0
    %v177 = vand.u32 %v32, 4294901760
    %v178 = vsub.f32 %v32, %v177
    %179 = vmatpush.msra.mxu0 %v178
    %v180 = vand.u32 %v31, 4294901760
    %v181 = vsub.f32 %v31, %v180
    %182 = vmatpush.msra.mxu0 %v181
    %v183 = vand.u32 %v30, 4294901760
    %v184 = vsub.f32 %v30, %v183
    %185 = vmatpush.msra.mxu0 %v184
    %v186 = vand.u32 %v29, 4294901760
    %v187 = vsub.f32 %v29, %v186
    %188 = vmatpush.msra.mxu0 %v187
    %v189 = vand.u32 %v28, 4294901760
    %v190 = vsub.f32 %v28, %v189
    %191 = vmatpush.msra.mxu0 %v190
    %v192 = vand.u32 %v27, 4294901760
    %v193 = vsub.f32 %v27, %v192
    %194 = vmatpush.msra.mxu0 %v193
    %v195 = vand.u32 %v26, 4294901760
    %v196 = vsub.f32 %v26, %v195
    %197 = vmatpush.msra.mxu0 %v196
    %v198 = vand.u32 %v25, 4294901760
    %v199 = vsub.f32 %v25, %v198
    %200 = vmatpush.msra.mxu0 %v199
    %v201 = vand.u32 %v24, 4294901760
    %v202 = vsub.f32 %v24, %v201
    %203 = vmatpush.msra.mxu0 %v202
    %v204 = vand.u32 %v23, 4294901760
    %v205 = vsub.f32 %v23, %v204
    %206 = vmatpush.msra.mxu0 %v205
    %v207 = vand.u32 %v22, 4294901760
    %v208 = vsub.f32 %v22, %v207
    %209 = vmatpush.msra.mxu0 %v208
    %v210 = vand.u32 %v21, 4294901760
    %v211 = vsub.f32 %v21, %v210
    %212 = vmatpush.msra.mxu0 %v211
    %v213 = vand.u32 %v20, 4294901760
    %v214 = vsub.f32 %v20, %v213
    %215 = vmatpush.msra.mxu0 %v214
    %v216 = vand.u32 %v19, 4294901760
    %v217 = vsub.f32 %v19, %v216
    %218 = vmatpush.msra.mxu0 %v217
    %v219 = vand.u32 %v18, 4294901760
    %v220 = vsub.f32 %v18, %v219
    %221 = vmatpush.msra.mxu0 %v220
    %v222 = vand.u32 %v17, 4294901760
    %v223 = vsub.f32 %v17, %v222
    %224 = vmatpush.msra.mxu0 %v223
    %v225 = vand.u32 %v16, 4294901760
    %v226 = vsub.f32 %v16, %v225
    %227 = vmatmul.f32.gmra.mxu0 %v226
    %v228 = vpop.f32.mrf.mxu0
    %v229 = vadd.f32 %v175, %v228
    %230 = vdwg.mxu0
    %v231 = vand.u32 %v32, 4294901760
    %232 = vmatpush.msra.mxu0 %v231
    %v233 = vand.u32 %v31, 4294901760
    %234 = vmatpush.msra.mxu0 %v233
    %v235 = vand.u32 %v30, 4294901760
    %236 = vmatpush.msra.mxu0 %v235
    %v237 = vand.u32 %v29, 4294901760
    %238 = vmatpush.msra.mxu0 %v237
    %v239 = vand.u32 %v28, 4294901760
    %240 = vmatpush.msra.mxu0 %v239
    %v241 = vand.u32 %v27, 4294901760
    %242 = vmatpush.msra.mxu0 %v241
    %v243 = vand.u32 %v26, 4294901760
    %244 = vmatpush.msra.mxu0 %v243
    %v245 = vand.u32 %v25, 4294901760
    %246 = vmatpush.msra.mxu0 %v245
    %v247 = vand.u32 %v24, 4294901760
    %248 = vmatpush.msra.mxu0 %v247
    %v249 = vand.u32 %v23, 4294901760
    %250 = vmatpush.msra.mxu0 %v249
    %v251 = vand.u32 %v22, 4294901760
    %252 = vmatpush.msra.mxu0 %v251
    %v253 = vand.u32 %v21, 4294901760
    %254 = vmatpush.msra.mxu0 %v253
    %v255 = vand.u32 %v20, 4294901760
    %256 = vmatpush.msra.mxu0 %v255
    %v257 = vand.u32 %v19, 4294901760
    %258 = vmatpush.msra.mxu0 %v257
    %v259 = vand.u32 %v18, 4294901760
    %260 = vmatpush.msra.mxu0 %v259
    %v261 = vand.u32 %v17, 4294901760
    %262 = vmatpush.msra.mxu0 %v261
    %v263 = vand.u32 %v16, 4294901760
    %v264 = vsub.f32 %v16, %v263
    %v265 = vand.u32 %v264, 4294901760
    %266 = vmatmul.f32.gmra.mxu0 %v265
    %v267 = vpop.f32.mrf.mxu0
    %v268 = vadd.f32 %v229, %v267
    %269 = vdwg.mxu0
    %v270 = vand.u32 %v32, 4294901760
    %v271 = vsub.f32 %v32, %v270
    %v272 = vand.u32 %v271, 4294901760
    %273 = vmatpush.msra.mxu0 %v272
    %v274 = vand.u32 %v31, 4294901760
    %v275 = vsub.f32 %v31, %v274
    %v276 = vand.u32 %v275, 4294901760
    %277 = vmatpush.msra.mxu0 %v276
    %v278 = vand.u32 %v30, 4294901760
    %v279 = vsub.f32 %v30, %v278
    %v280 = vand.u32 %v279, 4294901760
    %281 = vmatpush.msra.mxu0 %v280
    %v282 = vand.u32 %v29, 4294901760
    %v283 = vsub.f32 %v29, %v282
    %v284 = vand.u32 %v283, 4294901760
    %285 = vmatpush.msra.mxu0 %v284
    %v286 = vand.u32 %v28, 4294901760
    %v287 = vsub.f32 %v28, %v286
    %v288 = vand.u32 %v287, 4294901760
    %289 = vmatpush.msra.mxu0 %v288
    %v290 = vand.u32 %v27, 4294901760
    %v291 = vsub.f32 %v27, %v290
    %v292 = vand.u32 %v291, 4294901760
    %293 = vmatpush.msra.mxu0 %v292
    %v294 = vand.u32 %v26, 4294901760
    %v295 = vsub.f32 %v26, %v294
    %v296 = vand.u32 %v295, 4294901760
    %297 = vmatpush.msra.mxu0 %v296
    %v298 = vand.u32 %v25, 4294901760
    %v299 = vsub.f32 %v25, %v298
    %v300 = vand.u32 %v299, 4294901760
    %301 = vmatpush.msra.mxu0 %v300
    %v302 = vand.u32 %v24, 4294901760
    %v303 = vsub.f32 %v24, %v302
    %v304 = vand.u32 %v303, 4294901760
    %305 = vmatpush.msra.mxu0 %v304
    %v306 = vand.u32 %v23, 4294901760
    %v307 = vsub.f32 %v23, %v306
    %v308 = vand.u32 %v307, 4294901760
    %309 = vmatpush.msra.mxu0 %v308
    %v310 = vand.u32 %v22, 4294901760
    %v311 = vsub.f32 %v22, %v310
    %v312 = vand.u32 %v311, 4294901760
    %313 = vmatpush.msra.mxu0 %v312
    %v314 = vand.u32 %v21, 4294901760
    %v315 = vsub.f32 %v21, %v314
    %v316 = vand.u32 %v315, 4294901760
    %317 = vmatpush.msra.mxu0 %v316
    %v318 = vand.u32 %v20, 4294901760
    %v319 = vsub.f32 %v20, %v318
    %v320 = vand.u32 %v319, 4294901760
    %321 = vmatpush.msra.mxu0 %v320
    %v322 = vand.u32 %v19, 4294901760
    %v323 = vsub.f32 %v19, %v322
    %v324 = vand.u32 %v323, 4294901760
    %325 = vmatpush.msra.mxu0 %v324
    %v326 = vand.u32 %v18, 4294901760
    %v327 = vsub.f32 %v18, %v326
    %v328 = vand.u32 %v327, 4294901760
    %329 = vmatpush.msra.mxu0 %v328
    %v330 = vand.u32 %v17, 4294901760
    %v331 = vsub.f32 %v17, %v330
    %v332 = vand.u32 %v331, 4294901760
    %333 = vmatpush.msra.mxu0 %v332
    %v334 = vand.u32 %v16, 4294901760
    %335 = vmatmul.f32.gmra.mxu0 %v334
    %v336 = vpop.f32.mrf.mxu0
    %v337 = vadd.f32 %v268, %v336
    %338 = vdwg.mxu0
    %v339 = vand.u32 %v32, 4294901760
    %340 = vmatpush.msra.mxu0 %v339
    %v341 = vand.u32 %v31, 4294901760
    %342 = vmatpush.msra.mxu0 %v341
    %v343 = vand.u32 %v30, 4294901760
    %344 = vmatpush.msra.mxu0 %v343
    %v345 = vand.u32 %v29, 4294901760
    %346 = vmatpush.msra.mxu0 %v345
    %v347 = vand.u32 %v28, 4294901760
    %348 = vmatpush.msra.mxu0 %v347
    %v349 = vand.u32 %v27, 4294901760
    %350 = vmatpush.msra.mxu0 %v349
    %v351 = vand.u32 %v26, 4294901760
    %352 = vmatpush.msra.mxu0 %v351
    %v353 = vand.u32 %v25, 4294901760
    %354 = vmatpush.msra.mxu0 %v353
    %v355 = vand.u32 %v24, 4294901760
    %356 = vmatpush.msra.mxu0 %v355
    %v357 = vand.u32 %v23, 4294901760
    %358 = vmatpush.msra.mxu0 %v357
    %v359 = vand.u32 %v22, 4294901760
    %360 = vmatpush.msra.mxu0 %v359
    %v361 = vand.u32 %v21, 4294901760
    %362 = vmatpush.msra.mxu0 %v361
    %v363 = vand.u32 %v20, 4294901760
    %364 = vmatpush.msra.mxu0 %v363
    %v365 = vand.u32 %v19, 4294901760
    %366 = vmatpush.msra.mxu0 %v365
    %v367 = vand.u32 %v18, 4294901760
    %368 = vmatpush.msra.mxu0 %v367
    %v369 = vand.u32 %v17, 4294901760
    %370 = vmatpush.msra.mxu0 %v369
    %v371 = vand.u32 %v16, 4294901760
    %372 = vmatmul.f32.gmra.mxu0 %v371
    %v373 = vpop.f32.mrf.mxu0
    %v374 = vadd.f32 %v337, %v373
    %375 = vdwg.mxu0
    %v376 = vmul.f32 %v374, 0.5
    %v377 = vtanh.pop %v376
    %v378 = vadd.f32 %v377, 1.0
    %v379 = vmul.f32 %v378, 0.5
    %vm380 = vcmask 516096
    %381 = vst.msk [vmem:[#allocation3] sm:$0x1] %vm380, %v379
    // Predicated region
    $region14: #{tpu_custom_call.1} parent=1 // pred_check
      _
    $region15: #{tpu_custom_call.1} parent=1 // pred_check_branch
      %383 = sbr.rel (0) target = $region17
    $region16: #{tpu_custom_call.1} parent=1 // pred_region
      %385 = vsyncadd [#allocation4], 0
      %s387 = sshll.u32 [#allocation3], 4
      %s388 = int_to_ptr.vmem [resolvable:$true] %s387
      %s389 = sshll.u32 %s3, 4
      %s390 = int_to_ptr.hbm [resolvable:$true] %s389
      %392 = dma.vmem_to_hbm [thread:$0]  %s388, 16, %s390, [#allocation4]
    $region17: #{tpu_custom_call.1} parent=1 // pred_fallthru
      _
    // Predicated region
    $region18: #{tpu_custom_call.1} parent=1 // pred_check
      _
    $region19: #{tpu_custom_call.1} parent=1 // pred_check_branch
      %394 = sbr.rel (0) target = $region21
    $region20: #{tpu_custom_call.1} parent=1 // pred_region
      %396 = dma.done [#allocation4], 16
    $region21: #{tpu_custom_call.1} parent=1 // pred_fallthru
      _
    %397 = vsyncpa [#allocation4], 1

</llo_original>
